<compile_context>
chip_gen: v7x
topology: tpu7x:2x2x1
jax: 0.10.0
libtpu: 0.0.40
codegen_flags: <defaults>
</compile_context>

<pallas_src>
import functools

import jax
import jax.numpy as jnp
from jax.experimental import pallas as pl
from jax.experimental.pallas import tpu as pltpu


def _round_up(x, m):
    return (x + m - 1) // m * m


def mlp_kernel(x_ref, wt_ref, b_ref, o_ref):
    # x_ref:  (tm, n_in)   VMEM (bf16)
    # wt_ref: (n_in, tn)   VMEM (bf16, W^T tile)
    # b_ref:  (1, tn)      VMEM (f32)
    # o_ref:  (tm, tn)     VMEM
    y = jnp.dot(x_ref[...], wt_ref[...], preferred_element_type=jnp.float32)
    y = y + b_ref[...].astype(jnp.float32)     # broadcast bias over rows
    y = jnp.maximum(y, 0.1 * y)                # LeakyReLU(negative_slope=0.1)
    o_ref[...] = y.astype(o_ref.dtype)
    # TODO(synk): SharedDropout with p>0 in training mode would need in-kernel
    # PRNG (pltpu.prng_seed/prng_random_bits); p=0 / eval mode is identity
    # (the module default), so no dropout math here.


def prepare_params(weight, bias, compute_dtype=jnp.bfloat16):
    """One-time conversion from PyTorch nn.Linear layout (call once at setup).

    weight: (n_out, n_in) -> (n_in, Np) bf16, N zero-padded to a multiple of 128
    bias:   (n_out,)      -> (1, Np)    f32, same padding
    Zero weight/bias columns + LeakyReLU(0)=0 keep the padded lanes exactly zero,
    so slicing the output back to n_out is exact.
    """
    n_out, _ = weight.shape
    n_pad = _round_up(n_out, 128)
    wt = weight.T.astype(compute_dtype)
    b2d = bias.reshape(1, -1).astype(jnp.float32)
    if n_pad != n_out:
        wt = jnp.pad(wt, ((0, 0), (0, n_pad - n_out)))
        b2d = jnp.pad(b2d, ((0, 0), (0, n_pad - n_out)))
    return wt, b2d


@functools.partial(jax.jit, static_argnames=("n_out", "tm", "tn", "out_dtype"))
def mlp_forward(x, weight_t, bias2d, *, n_out=None, tm=512, tn=512, out_dtype=None):
    """y = LeakyReLU_0.1(x @ W^T + b).

    x: (..., n_in); weight_t/bias2d come from prepare_params (lane-padded, bf16).
    """
    orig_shape = x.shape
    n_in = orig_shape[-1]
    Np = weight_t.shape[1]                       # lane-padded n_out
    if n_out is None:
        n_out = Np
    if out_dtype is None:
        out_dtype = x.dtype

    x2d = x.reshape(-1, n_in).astype(weight_t.dtype)   # bf16 rows for the MXU
    M = x2d.shape[0]
    K = n_in

    # Tile selection: lane-dense N tiles (multiple of 128), 16-row (bf16 sublane)
    # aligned M tiles; ragged last M tile is masked by Pallas on store.
    tn_eff = min(tn, Np)
    tm_eff = min(tm, _round_up(M, 16))
    # v7x megacore: make sure there are >= 2 row tiles to shard across the 2 TCs.
    if M > 16 and pl.cdiv(M, tm_eff) < 2:
        tm_eff = _round_up(pl.cdiv(M, 2), 16)
    grid_m = pl.cdiv(M, tm_eff)

    x_isz = jnp.dtype(weight_t.dtype).itemsize
    o_isz = jnp.dtype(out_dtype).itemsize
    x_bytes = M * K * x_isz
    w_bytes = K * Np * x_isz
    b_bytes = Np * 4
    o_bytes = M * Np * o_isz

    if Np <= tn_eff:
        # Single N tile: 1-D grid over M; W/bias block index constant -> fetched
        # once from HBM and resident in VMEM for the whole call.
        grid = (grid_m,)
        in_specs = [
            pl.BlockSpec((tm_eff, K), lambda i: (i, 0)),
            pl.BlockSpec((K, tn_eff), lambda i: (0, 0)),
            pl.BlockSpec((1, tn_eff), lambda i: (0, 0)),
        ]
        out_spec = pl.BlockSpec((tm_eff, tn_eff), lambda i: (i, 0))
        dims = ("parallel",)
        bytes_accessed = x_bytes + w_bytes + b_bytes + o_bytes
    else:
        grid_n = pl.cdiv(Np, tn_eff)
        # Pick the loop order so the operand with the larger re-fetch cost stays
        # resident across the inner sweep.
        if (grid_m - 1) * w_bytes >= (grid_n - 1) * x_bytes:
            # j outer, i inner: W tile constant per inner sweep (x re-fetched per j).
            grid = (grid_n, grid_m)
            in_specs = [
                pl.BlockSpec((tm_eff, K), lambda j, i: (i, 0)),
                pl.BlockSpec((K, tn_eff), lambda j, i: (0, j)),
                pl.BlockSpec((1, tn_eff), lambda j, i: (0, j)),
            ]
            out_spec = pl.BlockSpec((tm_eff, tn_eff), lambda j, i: (i, j))
            bytes_accessed = grid_n * x_bytes + w_bytes + b_bytes + o_bytes
        else:
            # i outer, j inner: each x tile fetched once (W re-fetched per i).
            grid = (grid_m, grid_n)
            in_specs = [
                pl.BlockSpec((tm_eff, K), lambda i, j: (i, 0)),
                pl.BlockSpec((K, tn_eff), lambda i, j: (0, j)),
                pl.BlockSpec((1, tn_eff), lambda i, j: (0, j)),
            ]
            out_spec = pl.BlockSpec((tm_eff, tn_eff), lambda i, j: (i, j))
            bytes_accessed = x_bytes + grid_m * (w_bytes + b_bytes) + o_bytes
        dims = ("parallel", "parallel")

    cost = pl.CostEstimate(
        flops=2 * M * K * Np,
        transcendentals=0,
        bytes_accessed=int(bytes_accessed),
    )

    # Double-buffered VMEM footprint (+ headroom), capped well below v7x's 64 MiB.
    vmem_est = 2 * ((tm_eff * K + K * tn_eff) * x_isz + tn_eff * 4
                    + tm_eff * tn_eff * o_isz)
    vmem_limit = int(min(max(vmem_est + (4 << 20), 16 << 20), 48 << 20))

    out = pl.pallas_call(
        mlp_kernel,
        out_shape=jax.ShapeDtypeStruct((M, Np), out_dtype),
        grid_spec=pl.GridSpec(
            grid=grid,
            in_specs=in_specs,
            out_specs=out_spec,
        ),
        compiler_params=pltpu.CompilerParams(
            dimension_semantics=dims,
            vmem_limit_bytes=vmem_limit,
        ),
        cost_estimate=cost,
    )(x2d, weight_t, bias2d)

    out = out[:, :n_out] if Np != n_out else out
    return out.reshape(*orig_shape[:-1], n_out)


def orthogonal_init(key, n_out, n_in, dtype=jnp.float32):
    """Deterministic orthogonal init matching torch.nn.init.orthogonal_ semantics."""
    rows, cols = n_out, n_in
    flat = jax.random.normal(key, (max(rows, cols), min(rows, cols)), dtype=jnp.float32)
    q, r = jnp.linalg.qr(flat)
    d = jnp.diagonal(r)
    q = q * jnp.where(d >= 0, 1.0, -1.0)[None, :]
    if rows < cols:
        q = q.T
    return q[:rows, :cols].astype(dtype)


def _reference(x, weight, bias):
    # Reference with the same bf16 input/weight quantization, f32 accumulation.
    xb = x.astype(jnp.bfloat16).astype(jnp.float32)
    wb = weight.astype(jnp.bfloat16).astype(jnp.float32)
    y = xb @ wb.T + bias
    return jnp.where(y >= 0, y, 0.1 * y)


if __name__ == "__main__":
    batch, seq, n_in, n_out = 2, 8, 32, 32

    key = jax.random.PRNGKey(0)
    kx, kw = jax.random.split(key)

    x = jax.random.normal(kx, (batch, seq, n_in), dtype=jnp.float32)
    weight = orthogonal_init(kw, n_out, n_in)          # (n_out, n_in), PyTorch layout
    bias = jnp.zeros((n_out,), dtype=jnp.float32)      # zeros, per reset_parameters

    weight_t, bias2d = prepare_params(weight, bias)    # one-time layout conversion

    y = mlp_forward(x, weight_t, bias2d, n_out=n_out)
    jax.block_until_ready(y)

    ref = _reference(x, weight, bias)
    assert y.shape == (batch, seq, n_out)
    assert jnp.allclose(y.astype(jnp.float32), ref, atol=2e-2, rtol=2e-2)

    # Ragged last-M-tile path (no padding of x; Pallas masks the overhang stores).
    x2 = jax.random.normal(jax.random.PRNGKey(1), (3, 5, n_in), dtype=jnp.float32)
    y2 = mlp_forward(x2, weight_t, bias2d, n_out=n_out)
    jax.block_until_ready(y2)
    ref2 = _reference(x2, weight, bias)
    assert y2.shape == (3, 5, n_out)
    assert jnp.allclose(y2.astype(jnp.float32), ref2, atol=2e-2, rtol=2e-2)

    print("KERNEL_OK")
</pallas_src>

<mosaic_0001>
module attributes {stable_mosaic.version = 11 : i64} {
  func.func @mlp_kernel(%arg0: i32, %arg1: memref<16x32xbf16, #tpu.memory_space<vmem>>, %arg2: memref<32x128xbf16, #tpu.memory_space<vmem>>, %arg3: memref<1x128xf32, #tpu.memory_space<vmem>>, %arg4: memref<16x128xf32, #tpu.memory_space<vmem>>) attributes {dimension_semantics = [#tpu.dimension_semantics<parallel>], iteration_bounds = array<i64: 1>, scalar_prefetch = 0 : i64, scratch_operands = 0 : i64, tpu.core_type = #tpu.core_type<tc>, window_params = [{transform_indices = @transform_0, window_bounds = array<i64: 16, 32>}, {pipeline_mode = #tpu.pipeline_mode<synchronous>, transform_indices = @transform_1, window_bounds = array<i64: 32, 128>}, {pipeline_mode = #tpu.pipeline_mode<synchronous>, transform_indices = @transform_2, window_bounds = array<i64: 1, 128>}, {transform_indices = @transform_3, window_bounds = array<i64: 16, 128>}]} {
    %c0 = arith.constant 0 : index
    %c0_0 = arith.constant 0 : index
    %0 = vector.load %arg1[%c0, %c0_0] : memref<16x32xbf16, #tpu.memory_space<vmem>>, vector<16x32xbf16>
    %c0_1 = arith.constant 0 : index
    %c0_2 = arith.constant 0 : index
    %1 = vector.load %arg2[%c0_1, %c0_2] : memref<32x128xbf16, #tpu.memory_space<vmem>>, vector<32x128xbf16>
    %cst = arith.constant dense<0.000000e+00> : vector<16x128xf32>
    %2 = tpu.matmul %0, %1, %cst {dimension_numbers = #tpu.dot_dimension_numbers<[1], [0], [0], [1], [0, 0, 1, 1], [], []>} : vector<16x32xbf16>, vector<32x128xbf16>, vector<16x128xf32> -> vector<16x128xf32>
    %c0_3 = arith.constant 0 : index
    %c0_4 = arith.constant 0 : index
    %3 = vector.load %arg3[%c0_3, %c0_4] : memref<1x128xf32, #tpu.memory_space<vmem>>, vector<1x128xf32>
    %4 = vector.broadcast %3 : vector<1x128xf32> to vector<16x128xf32>
    %5 = arith.addf %2, %4 : vector<16x128xf32>
    %cst_5 = arith.constant 1.000000e-01 : f32
    %6 = vector.broadcast %cst_5 : f32 to vector<16x128xf32>
    %7 = arith.mulf %6, %5 : vector<16x128xf32>
    %8 = arith.maximumf %5, %7 : vector<16x128xf32>
    %c0_6 = arith.constant 0 : index
    %c0_7 = arith.constant 0 : index
    %9 = vector.load %arg4[%c0_6, %c0_7] : memref<16x128xf32, #tpu.memory_space<vmem>>, vector<16x128xf32>
    tpu.vector_store %arg4[%c0_6, %c0_7], %8 {strides = array<i32>} : memref<16x128xf32, #tpu.memory_space<vmem>>, vector<16x128xf32>,
    return
  }
  func.func @transform_0(%arg0: i32) -> (i32, i32) {
    %c0_i32 = arith.constant 0 : i32
    %c0_i32_0 = arith.constant 0 : i32
    return %arg0, %c0_i32 : i32, i32
  }
  func.func @transform_1(%arg0: i32) -> (i32, i32) {
    %c0_i32 = arith.constant 0 : i32
    %c0_i32_0 = arith.constant 0 : i32
    %c0_i32_1 = arith.constant 0 : i32
    return %c0_i32, %c0_i32_0 : i32, i32
  }
  func.func @transform_2(%arg0: i32) -> (i32, i32) {
    %c0_i32 = arith.constant 0 : i32
    %c0_i32_0 = arith.constant 0 : i32
    %c0_i32_1 = arith.constant 0 : i32
    return %c0_i32, %c0_i32_0 : i32, i32
  }
  func.func @transform_3(%arg0: i32) -> (i32, i32) {
    %c0_i32 = arith.constant 0 : i32
    %c0_i32_0 = arith.constant 0 : i32
    return %arg0, %c0_i32 : i32, i32
  }
}

</mosaic_0001>

<llo_original>
// kernel: mlp_forward.1
$region0: #{mlp_forward.1}
  #allocation0 [shape = 'u32[]', space=smem, size = 0x4, offset = 0x4, fixed_abs, tag = 'smem constant byte address 0x4 - core index']
  #allocation1 [shape = 'u32[144,128]{1,0:T(1,128)}', space=vmem, size = 0x12000, scoped, tag = 'internal scratch']
  %s0 = inlined_call_operand.vmem [shape: bf16[16,32], index: 0, kind: input, shape index: {}]
  %s1 = inlined_call_operand.vmem [shape: bf16[32,128], index: 1, kind: input, shape index: {}]
  %s2 = inlined_call_operand.vmem [shape: f32[1,128], index: 2, kind: input, shape index: {}]
  %s3 = inlined_call_operand.vmem [shape: f32[16,128], index: 3, kind: output, shape index: {}]
  %s4 = sld [smem:[#allocation0]]
  $region22: #{mlp_forward.1} parent=0
    _
  %s6 = ssub.s32 1, %s4
  %s7 = scalar_select 0, %s6, %s4
  // Predicated region
  $region2: #{mlp_forward.1} parent=0 // pred_check
    _
  $region3: #{mlp_forward.1} parent=0 // pred_check_branch
    %9 = sbr.rel (0) target = $region5
  $region4: #{mlp_forward.1} parent=0 // pred_region
    _
  $region5: #{mlp_forward.1} parent=0 // pred_fallthru
    _
  // Predicated region
  $region6: #{mlp_forward.1} parent=0 // pred_check
    _
  $region7: #{mlp_forward.1} parent=0 // pred_check_branch
    %11 = sbr.rel (0) target = $region9
  $region8: #{mlp_forward.1} parent=0 // pred_region
    _
  $region9: #{mlp_forward.1} parent=0 // pred_fallthru
    _
  // Predicated region
  $region10: #{mlp_forward.1} parent=0 // pred_check
    _
  $region11: #{mlp_forward.1} parent=0 // pred_check_branch
    %13 = sbr.rel (0) target = $region13
  $region12: #{mlp_forward.1} parent=0 // pred_region
    _
  $region13: #{mlp_forward.1} parent=0 // pred_fallthru
    _
  %v15 = vld [vmem:[%s0] sm:$0xf]
  %v16 = vld [vmem:[%s0 + $0x4] sm:$0xf]
  %v17 = vld [vmem:[%s1] sm:$0xf]
  %v18 = vld [vmem:[%s1 + $0x4] sm:$0xf]
  %v19 = vld [vmem:[%s1 + $0x8] sm:$0xf]
  %v20 = vld [vmem:[%s1 + $0xc] sm:$0xf]
  %v21 = vld [vmem:[%s2] sm:$0x1]
  %v23 = vlaneseq
  %v24 = vshrl.u32 %v23, 7
  %v25 = vsub.s32 0, %v24
  %v26 = vrot.slane %v21, %v25
  %v30 = vunpack.c.l.b16 %v15
  %v31 = vunpack.c.l.b16 %v16
  %v32 = vpack.c.b16 %v31, %v30
  %v37 = vunpack.c.l.b16 %v17
  %v38 = vunpack.c.l.b16 %v18
  %v39 = vunpack.c.l.b16 %v19
  %v40 = vunpack.c.l.b16 %v20
  %v41 = vpack.c.b16 %v38, %v37
  %v42 = vpack.c.b16 %v40, %v39
  %vm45 = vcmask 261120
  %v47 = vsel %vm45, %v32, 0
  %49 = vmatprep.subr.bf16.mxu0 0
  %50 = vmatpush1.bf16.msra.mxu0 %v41
  %51 = vmatprep.subr.bf16.mxu0 0
  %52 = vmatpush1.bf16.msra.mxu0 %v42
  %53 = vmatprep.subr.bf16.mxu0 0
  %54 = vmatpush1.bf16.msra.mxu0 0
  %55 = vmatprep.subr.bf16.mxu0 0
  %56 = vmatpush1.bf16.msra.mxu0 0
  %57 = vmatprep.subr.bf16.mxu0 0
  %58 = vmatpush1.bf16.msra.mxu0 0
  %59 = vmatprep.subr.bf16.mxu0 0
  %60 = vmatpush1.bf16.msra.mxu0 0
  %61 = vmatprep.subr.bf16.mxu0 0
  %62 = vmatpush1.bf16.msra.mxu0 0
  %63 = vmatprep.subr.bf16.mxu0 0
  %64 = vmatpush1.bf16.msra.mxu0 0
  %65 = vmatprep.subr.bf16.mxu0 0
  %66 = vmatpush1.bf16.msra.mxu0 0
  %67 = vmatprep.subr.bf16.mxu0 0
  %68 = vmatpush1.bf16.msra.mxu0 0
  %69 = vmatprep.subr.bf16.mxu0 0
  %70 = vmatpush1.bf16.msra.mxu0 0
  %71 = vmatprep.subr.bf16.mxu0 0
  %72 = vmatpush1.bf16.msra.mxu0 0
  %73 = vmatprep.subr.bf16.mxu0 0
  %74 = vmatpush1.bf16.msra.mxu0 0
  %75 = vmatprep.subr.bf16.mxu0 0
  %76 = vmatpush1.bf16.msra.mxu0 0
  %77 = vmatprep.subr.bf16.mxu0 0
  %78 = vmatpush1.bf16.msra.mxu0 0
  %79 = vmatprep.subr.bf16.mxu0 0
  %80 = vmatpush1.bf16.msra.mxu0 0
  %81 = vmatprep.mubr.bf16.mxu0 0
  %82 = vmatmul.mubr.bf16.gmra.mrb[0].mxu0 %v47
  %v83 = vpop.f32.mrb[0].mxu0
  %v84 = vadd.f32 %v26, %v83
  %v85 = vpop.f32.mrb[0].mxu0
  %v86 = vpop.f32.mrb[0].mxu0
  %v87 = vadd.f32 %v26, %v86
  %v88 = vpop.f32.mrb[0].mxu0
  %89 = vdwg.mxu0
  %v90 = vmul.f32 %v84, 0.1
  %v91 = vmul.f32 %v87, 0.1
  %v92 = vmax.f32 %v84, %v90
  %v93 = vmax.f32 %v87, %v91
  %94 = vst [vmem:[%s3] sm:$0xff] %v92
  %95 = vst [vmem:[%s3 + $0x8] sm:$0xff] %v93
  // Predicated region
  $region14: #{mlp_forward.1} parent=0 // pred_check
    _
  $region15: #{mlp_forward.1} parent=0 // pred_check_branch
    %97 = sbr.rel (0) target = $region17
  $region16: #{mlp_forward.1} parent=0 // pred_region
    _
  $region17: #{mlp_forward.1} parent=0 // pred_fallthru
    _
  // Predicated region
  $region18: #{mlp_forward.1} parent=0 // pred_check
    _
  $region19: #{mlp_forward.1} parent=0 // pred_check_branch
    %99 = sbr.rel (0) target = $region21
  $region20: #{mlp_forward.1} parent=0 // pred_region
    _
  $region21: #{mlp_forward.1} parent=0 // pred_fallthru
    _

</llo_original>
